<compile_context>
chip_gen: v7x
topology: tpu7x:2x2x1
jax: 0.10.0
libtpu: 0.0.40
codegen_flags: <defaults>
</compile_context>

<pallas_src>
import functools

import jax
import jax.numpy as jnp
from jax import lax
from jax.experimental import pallas as pl
from jax.experimental.pallas import tpu as pltpu

LANES = 128
SUBLANES = 8


def _netx_kernel(x_ref, y_ref, o_ref, acc_ref, *,
                 block_rows, blocks_per_split, rows_valid, need_row_mask):
    """Accumulate sum(sigmoid(x) * y) of one (block_rows, 128) tile."""
    c = pl.program_id(0)   # per-TensorCore split ("parallel")
    i = pl.program_id(1)   # sequential reduction axis ("arbitrary")

    @pl.when(i == 0)
    def _():
        acc_ref[...] = jnp.zeros_like(acc_ref)

    xv = x_ref[...].astype(jnp.float32)
    yv = y_ref[...].astype(jnp.float32)
    prod = jax.nn.sigmoid(xv) * yv

    if need_row_mask:
        # Mask rows past the real data (ragged tail / over-covered blocks).
        row_start = (c * blocks_per_split + i) * block_rows
        row_ids = lax.broadcasted_iota(jnp.int32, (block_rows, LANES), 0)
        prod = jnp.where(row_start + row_ids < rows_valid, prod, 0.0)

    # Fold (block_rows, 128) -> (8, 128): reduction over a non-minor axis is
    # pure elementwise vreg adds (VPU), no XLU on the hot path.
    acc_ref[...] += prod.reshape(block_rows // SUBLANES, SUBLANES, LANES).sum(axis=0)

    @pl.when(i == pl.num_programs(1) - 1)
    def _():
        o_ref[0] = acc_ref[...]


def net_x_forward(x_param, y, *, block_rows=2048):
    """JAX wrapper reproducing Net_x.forward(y) -> scalar mean."""
    assert x_param.shape == y.shape and x_param.ndim == 1
    n = x_param.shape[0]

    # Pad only if N is not a multiple of 128 (zeros in y keep padding inert;
    # the reshape to (rows, 128) is layout-compatible -> no extra HBM pass).
    n_pad = ((n + LANES - 1) // LANES) * LANES
    if n_pad != n:
        x_p = jnp.pad(x_param, (0, n_pad - n))
        y_p = jnp.pad(y, (0, n_pad - n))
    else:
        x_p, y_p = x_param, y

    rows = n_pad // LANES
    x2 = x_p.reshape(rows, LANES)
    y2 = y_p.reshape(rows, LANES)

    # Block sizing: large, sublane-aligned, VMEM-safe on all generations
    # (default 2048 rows = 1 MiB f32 per input block; 2 inputs x 2 buffers
    # = 4 MiB, well under the 16/32 MiB scoped VMEM defaults).
    block_rows = max(SUBLANES, min(block_rows,
                                   ((rows + SUBLANES - 1) // SUBLANES) * SUBLANES))
    block_rows = ((block_rows + SUBLANES - 1) // SUBLANES) * SUBLANES

    total_blocks = pl.cdiv(rows, block_rows)
    num_splits = 2 if total_blocks >= 2 else 1   # megacore split on v7x
    blocks_per_split = pl.cdiv(total_blocks, num_splits)
    covered_rows = num_splits * blocks_per_split * block_rows
    need_row_mask = covered_rows > rows
    max_block = total_blocks - 1

    def in_map(c, i):
        # Clamp so over-covered logical blocks read a valid tile; the kernel's
        # row mask zeroes their contribution.
        return (jnp.minimum(c * blocks_per_split + i, max_block), 0)

    kernel = functools.partial(
        _netx_kernel,
        block_rows=block_rows,
        blocks_per_split=blocks_per_split,
        rows_valid=rows,
        need_row_mask=need_row_mask,
    )

    bytes_accessed = (x2.size * x2.dtype.itemsize
                      + y2.size * y2.dtype.itemsize
                      + num_splits * SUBLANES * LANES * 4)

    partials = pl.pallas_call(
        kernel,
        out_shape=jax.ShapeDtypeStruct((num_splits, SUBLANES, LANES), jnp.float32),
        grid_spec=pltpu.PrefetchScalarGridSpec(
            num_scalar_prefetch=0,
            grid=(num_splits, blocks_per_split),
            in_specs=[
                pl.BlockSpec((block_rows, LANES), in_map),
                pl.BlockSpec((block_rows, LANES), in_map),
            ],
            out_specs=pl.BlockSpec((1, SUBLANES, LANES), lambda c, i: (c, 0, 0)),
            scratch_shapes=[pltpu.VMEM((SUBLANES, LANES), jnp.float32)],
        ),
        compiler_params=pltpu.CompilerParams(
            dimension_semantics=("parallel", "arbitrary"),
        ),
        cost_estimate=pl.CostEstimate(
            flops=5 * n, transcendentals=n, bytes_accessed=bytes_accessed),
    )(x2, y2)

    # Single tiny final reduction + divide by the *unpadded* length.
    return jnp.sum(partials) / jnp.float32(n)


if __name__ == "__main__":
    # N plays the role of tr.data.shape[0]; deliberately not a multiple of 128
    # to exercise the lane-pad + in-kernel row-mask path.
    N = 10_000
    key = jax.random.PRNGKey(0)

    # Module __init__: self.x = zeros(N) (learnable parameter).
    x_param = jnp.zeros((N,), dtype=jnp.float32)
    # Forward input y.
    y = jax.random.normal(key, (N,), dtype=jnp.float32)

    out = jax.block_until_ready(net_x_forward(x_param, y))

    # Reference check in plain JAX (sigmoid(0) = 0.5 -> 0.5 * mean(y)).
    ref = jnp.mean(jax.nn.sigmoid(x_param) * y)
    assert jnp.allclose(out, ref, atol=1e-6, rtol=1e-5), (out, ref)

    # Exercise the multi-block + 2-way "parallel" split + clamp/mask path.
    out2 = jax.block_until_ready(net_x_forward(x_param, y, block_rows=16))
    assert jnp.allclose(out2, ref, atol=1e-6, rtol=1e-5), (out2, ref)

    print("KERNEL_OK")
</pallas_src>

<mosaic_0001>
module attributes {stable_mosaic.version = 11 : i64} {
  func.func @_netx_kernel(%arg0: i32, %arg1: i32, %arg2: memref<80x128xf32, #tpu.memory_space<vmem>>, %arg3: memref<80x128xf32, #tpu.memory_space<vmem>>, %arg4: memref<1x8x128xf32, #tpu.memory_space<vmem>>, %arg5: memref<8x128xf32, #tpu.memory_space<vmem>>) attributes {dimension_semantics = [#tpu.dimension_semantics<parallel>, #tpu.dimension_semantics<arbitrary>], iteration_bounds = array<i64: 1, 1>, scalar_prefetch = 0 : i64, scratch_operands = 1 : i64, tpu.core_type = #tpu.core_type<tc>, window_params = [{transform_indices = @transform_0, window_bounds = array<i64: 80, 128>}, {transform_indices = @transform_1, window_bounds = array<i64: 80, 128>}, {transform_indices = @transform_2, window_bounds = array<i64: 1, 8, 128>}]} {
    %c0_i32 = arith.constant 0 : i32
    %0 = arith.cmpi eq, %arg1, %c0_i32 : i32
    %1 = arith.extui %0 : i1 to i32
    %c0_i32_0 = arith.constant 0 : i32
    %2 = arith.cmpi ne, %1, %c0_i32_0 : i32
    scf.if %2 {
      %cst_12 = arith.constant 0.000000e+00 : f32
      %29 = vector.broadcast %cst_12 : f32 to vector<8x128xf32>
      %c0_13 = arith.constant 0 : index
      %c0_14 = arith.constant 0 : index
      %30 = vector.load %arg5[%c0_13, %c0_14] : memref<8x128xf32, #tpu.memory_space<vmem>>, vector<8x128xf32>
      tpu.vector_store %arg5[%c0_13, %c0_14], %29 {strides = array<i32>} : memref<8x128xf32, #tpu.memory_space<vmem>>, vector<8x128xf32>,
    } else {
    }
    %c0 = arith.constant 0 : index
    %c0_1 = arith.constant 0 : index
    %3 = vector.load %arg2[%c0, %c0_1] : memref<80x128xf32, #tpu.memory_space<vmem>>, vector<80x128xf32>
    %c0_2 = arith.constant 0 : index
    %c0_3 = arith.constant 0 : index
    %4 = vector.load %arg3[%c0_2, %c0_3] : memref<80x128xf32, #tpu.memory_space<vmem>>, vector<80x128xf32>
    %5 = arith.negf %3 : vector<80x128xf32>
    %6 = math.exp %5 : vector<80x128xf32>
    %cst = arith.constant 1.000000e+00 : f32
    %7 = vector.broadcast %cst : f32 to vector<80x128xf32>
    %8 = arith.addf %7, %6 : vector<80x128xf32>
    %9 = arith.divf %7, %8 : vector<80x128xf32>
    %10 = arith.mulf %9, %4 : vector<80x128xf32>
    %c1_i32 = arith.constant 1 : i32
    %11 = arith.muli %arg0, %c1_i32 : i32
    %12 = arith.addi %11, %arg1 : i32
    %c80_i32 = arith.constant 80 : i32
    %13 = arith.muli %12, %c80_i32 : i32
    %14 = tpu.iota {dimensions = array<i32: 0>} : vector<80x128xi32>
    %15 = vector.broadcast %13 : i32 to vector<80x128xi32>
    %16 = arith.addi %15, %14 : vector<80x128xi32>
    %c79_i32 = arith.constant 79 : i32
    %17 = vector.broadcast %c79_i32 : i32 to vector<80x128xi32>
    %18 = arith.cmpi slt, %16, %17 : vector<80x128xi32>
    %cst_4 = arith.constant 0.000000e+00 : f32
    %19 = vector.broadcast %cst_4 : f32 to vector<80x128xf32>
    %20 = arith.select %18, %10, %19 : vector<80x128xi1>, vector<80x128xf32>
    %c0_5 = arith.constant 0 : index
    %c0_6 = arith.constant 0 : index
    %21 = vector.load %arg5[%c0_5, %c0_6] : memref<8x128xf32, #tpu.memory_space<vmem>>, vector<8x128xf32>
    %22 = vector.shape_cast %20 : vector<80x128xf32> to vector<10x8x128xf32>
    %cst_7 = arith.constant dense<0.000000e+00> : vector<8x128xf32>
    %23 = vector.multi_reduction <add>, %22, %cst_7 [0] : vector<10x8x128xf32> to vector<8x128xf32>
    %24 = arith.addf %21, %23 : vector<8x128xf32>
    %c0_8 = arith.constant 0 : index
    %c0_9 = arith.constant 0 : index
    %25 = vector.load %arg5[%c0_8, %c0_9] : memref<8x128xf32, #tpu.memory_space<vmem>>, vector<8x128xf32>
    tpu.vector_store %arg5[%c0_8, %c0_9], %24 {strides = array<i32>} : memref<8x128xf32, #tpu.memory_space<vmem>>, vector<8x128xf32>,
    %c0_i32_10 = arith.constant 0 : i32
    %26 = arith.cmpi eq, %arg1, %c0_i32_10 : i32
    %27 = arith.extui %26 : i1 to i32
    %c0_i32_11 = arith.constant 0 : i32
    %28 = arith.cmpi ne, %27, %c0_i32_11 : i32
    scf.if %28 {
      %c0_12 = arith.constant 0 : index
      %c0_13 = arith.constant 0 : index
      %29 = vector.load %arg5[%c0_12, %c0_13] : memref<8x128xf32, #tpu.memory_space<vmem>>, vector<8x128xf32>
      %c0_14 = arith.constant 0 : index
      %c0_15 = arith.constant 0 : index
      %c0_16 = arith.constant 0 : index
      %30 = vector.load %arg4[%c0_14, %c0_15, %c0_16] : memref<1x8x128xf32, #tpu.memory_space<vmem>>, vector<1x8x128xf32>
      %31 = vector.shape_cast %30 : vector<1x8x128xf32> to vector<8x128xf32>
      %32 = vector.shape_cast %29 : vector<8x128xf32> to vector<1x8x128xf32>
      tpu.vector_store %arg4[%c0_14, %c0_15, %c0_16], %32 {strides = array<i32>} : memref<1x8x128xf32, #tpu.memory_space<vmem>>, vector<1x8x128xf32>,
    } else {
    }
    return
  }
  func.func @transform_0(%arg0: i32, %arg1: i32) -> (i32, i32) {
    %c1_i32 = arith.constant 1 : i32
    %0 = arith.muli %arg0, %c1_i32 : i32
    %1 = arith.addi %0, %arg1 : i32
    %c0_i32 = arith.constant 0 : i32
    %2 = arith.minsi %1, %c0_i32 : i32
    %c0_i32_0 = arith.constant 0 : i32
    %c0_i32_1 = arith.constant 0 : i32
    return %2, %c0_i32_0 : i32, i32
  }
  func.func @transform_1(%arg0: i32, %arg1: i32) -> (i32, i32) {
    %c1_i32 = arith.constant 1 : i32
    %0 = arith.muli %arg0, %c1_i32 : i32
    %1 = arith.addi %0, %arg1 : i32
    %c0_i32 = arith.constant 0 : i32
    %2 = arith.minsi %1, %c0_i32 : i32
    %c0_i32_0 = arith.constant 0 : i32
    %c0_i32_1 = arith.constant 0 : i32
    return %2, %c0_i32_0 : i32, i32
  }
  func.func @transform_2(%arg0: i32, %arg1: i32) -> (i32, i32, i32) {
    %c0_i32 = arith.constant 0 : i32
    %c0_i32_0 = arith.constant 0 : i32
    %c0_i32_1 = arith.constant 0 : i32
    return %arg0, %c0_i32, %c0_i32_0 : i32, i32, i32
  }
}

</mosaic_0001>

<llo_original>
// kernel: tpu_custom_call.1
$region0: #{tpu_custom_call.1}
  #allocation0 [shape = 'u32[]', space=smem, size = 0x4, offset = 0x4, fixed_abs, tag = 'smem constant byte address 0x4 - core index']
  #allocation1 [shape = 'u32[144,128]{1,0:T(1,128)}', space=vmem, size = 0x12000, scoped, tag = 'internal scratch']
  #allocation2 [shape = 'f32[8,128]{1,0:T(8,128)}', space=vmem, size = 0x1000, scoped, tag = 'scratch operand']
  %s0 = inlined_call_operand.hbm [shape: f32[79,128], index: 0, kind: input, shape index: {}]
  %s1 = inlined_call_operand.hbm [shape: f32[79,128], index: 1, kind: input, shape index: {}]
  %s2 = inlined_call_operand.hbm [shape: f32[1,8,128], index: 2, kind: output, shape index: {}]
  %s3 = sld [smem:[#allocation0]]
  $region34: #{tpu_custom_call.1} parent=0
    _
  %s5 = ssub.s32 1, %s3
  %s6 = scalar_select 0, %s5, %s3
  $region1: #{tpu_custom_call.1} parent=0
    #allocation3 [shape = 'u8[40960]{0}', space=vmem, size = 0xa000, scoped, tag = 'input window, operand 0, single buffered']
    #allocation4 [shape = 's32[1]{0}', space=sflag, size = 0x4, scoped, tag = 'scoped memory for tpu_custom_call.1']
    #allocation5 [shape = 's32[1]{0}', space=sflag, size = 0x4, scoped, tag = 'scoped memory for tpu_custom_call.1']
    #allocation6 [shape = 'u8[40960]{0}', space=vmem, size = 0xa000, scoped, tag = 'input window, operand 1, single buffered']
    #allocation7 [shape = 's32[1]{0}', space=sflag, size = 0x4, scoped, tag = 'scoped memory for tpu_custom_call.1']
    #allocation8 [shape = 'u8[4096]{0}', space=vmem, size = 0x1000, scoped, tag = 'output window, operand 0, single buffered']
    %7 = vsyncpa [#allocation4], 0
    %8 = vsyncpa [#allocation7], 0
    %9 = vsyncpa [#allocation5], 0
    // Predicated region
    $region2: #{tpu_custom_call.1} parent=1 // pred_check
      _
    $region3: #{tpu_custom_call.1} parent=1 // pred_check_branch
      %11 = sbr.rel (0) target = $region5
    $region4: #{tpu_custom_call.1} parent=1 // pred_region
      %s12 = sadd.s32 0, 0
      %p13 = scmp.lt.s32.totalorder %s12, 0
      %s14 = scalar_select %p13, %s12, 0
      %s15 = smul.u32 10, %s14
      %s17 = ssub.s32 1280, 1280
      %18 = vsyncadd [#allocation4], %s17
      %s19 = smul.addr %s15, 128
      %s20 = scalar_lea.hbm %s0, %s19
      %s21 = sshll.u32 [#allocation3], 4
      %s22 = int_to_ptr.vmem [resolvable:$true] %s21
      %27 = dma.hbm_to_vmem [thread:$0]  %s20, 1280, %s22, [#allocation4], 128, 128, 8
    $region5: #{tpu_custom_call.1} parent=1 // pred_fallthru
      _
    // Predicated region
    $region6: #{tpu_custom_call.1} parent=1 // pred_check
      _
    $region7: #{tpu_custom_call.1} parent=1 // pred_check_branch
      %29 = sbr.rel (0) target = $region9
    $region8: #{tpu_custom_call.1} parent=1 // pred_region
      %s30 = sadd.s32 0, 0
      %p31 = scmp.lt.s32.totalorder %s30, 0
      %s32 = scalar_select %p31, %s30, 0
      %s33 = smul.u32 10, %s32
      %s35 = ssub.s32 1280, 1280
      %36 = vsyncadd [#allocation7], %s35
      %s37 = smul.addr %s33, 128
      %s38 = scalar_lea.hbm %s1, %s37
      %s39 = sshll.u32 [#allocation6], 4
      %s40 = int_to_ptr.vmem [resolvable:$true] %s39
      %45 = dma.hbm_to_vmem [thread:$0]  %s38, 1280, %s40, [#allocation7], 128, 128, 8
    $region9: #{tpu_custom_call.1} parent=1 // pred_fallthru
      _
    // Predicated region
    $region10: #{tpu_custom_call.1} parent=1 // pred_check
      _
    $region11: #{tpu_custom_call.1} parent=1 // pred_check_branch
      %47 = sbr.rel (0) target = $region13
    $region12: #{tpu_custom_call.1} parent=1 // pred_region
      %48 = dma.done [#allocation4], 1280
    $region13: #{tpu_custom_call.1} parent=1 // pred_fallthru
      _
    // Predicated region
    $region14: #{tpu_custom_call.1} parent=1 // pred_check
      _
    $region15: #{tpu_custom_call.1} parent=1 // pred_check_branch
      %50 = sbr.rel (0) target = $region17
    $region16: #{tpu_custom_call.1} parent=1 // pred_region
      %51 = dma.done [#allocation7], 1280
    $region17: #{tpu_custom_call.1} parent=1 // pred_fallthru
      _
    %s52 = sadd.s32 0, 0
    %p53 = scmp.lt.s32.totalorder %s52, 0
    %s54 = scalar_select %p53, %s52, 0
    %s55 = smul.u32 10, %s54
    %s56 = sadd.s32 0, 0
    %p57 = scmp.lt.s32.totalorder %s56, 0
    %s58 = scalar_select %p57, %s56, 0
    %s59 = smul.u32 10, %s58
    %p60 = scmp.eq.s32.totalorder 0, 0
    // Predicated region
    $region18: #{tpu_custom_call.1} parent=1 // pred_check
      %p61 = pneg %p60
    $region19: #{tpu_custom_call.1} parent=1 // pred_check_branch
      %63 = sbr.rel (%p61) target = $region21
    $region20: #{tpu_custom_call.1} parent=1 // pred_region
      %64 = vst [vmem:[#allocation2] sm:$0xff] 0.0
    $region21: #{tpu_custom_call.1} parent=1 // pred_fallthru
      _
    %v65 = vld [vmem:[#allocation3] sm:$0xff]
    %v66 = vld [vmem:[#allocation3 + $0x8] sm:$0xff]
    %v67 = vld [vmem:[#allocation3 + $0x10] sm:$0xff]
    %v68 = vld [vmem:[#allocation3 + $0x18] sm:$0xff]
    %v69 = vld [vmem:[#allocation3 + $0x20] sm:$0xff]
    %v70 = vld [vmem:[#allocation3 + $0x28] sm:$0xff]
    %v71 = vld [vmem:[#allocation3 + $0x30] sm:$0xff]
    %v72 = vld [vmem:[#allocation3 + $0x38] sm:$0xff]
    %v73 = vld [vmem:[#allocation3 + $0x40] sm:$0xff]
    %v74 = vld [vmem:[#allocation3 + $0x48] sm:$0xff]
    %v75 = vld [vmem:[#allocation6] sm:$0xff]
    %v76 = vld [vmem:[#allocation6 + $0x8] sm:$0xff]
    %v77 = vld [vmem:[#allocation6 + $0x10] sm:$0xff]
    %v78 = vld [vmem:[#allocation6 + $0x18] sm:$0xff]
    %v79 = vld [vmem:[#allocation6 + $0x20] sm:$0xff]
    %v80 = vld [vmem:[#allocation6 + $0x28] sm:$0xff]
    %v81 = vld [vmem:[#allocation6 + $0x30] sm:$0xff]
    %v82 = vld [vmem:[#allocation6 + $0x38] sm:$0xff]
    %v83 = vld [vmem:[#allocation6 + $0x40] sm:$0xff]
    %v84 = vld [vmem:[#allocation6 + $0x48] sm:$0xff]
    %v85 = vxor.u32 %v65, 2147483648
    %v86 = vxor.u32 %v66, 2147483648
    %v87 = vxor.u32 %v67, 2147483648
    %v88 = vxor.u32 %v68, 2147483648
    %v89 = vxor.u32 %v69, 2147483648
    %v90 = vxor.u32 %v70, 2147483648
    %v91 = vxor.u32 %v71, 2147483648
    %v92 = vxor.u32 %v72, 2147483648
    %v93 = vxor.u32 %v73, 2147483648
    %v94 = vxor.u32 %v74, 2147483648
    %v95 = vmul.f32 %v85, 1.442695
    %v96 = vpow.pop %v95
    %v97 = vmul.f32 %v86, 1.442695
    %v98 = vpow.pop %v97
    %v99 = vmul.f32 %v87, 1.442695
    %v100 = vpow.pop %v99
    %v101 = vmul.f32 %v88, 1.442695
    %v102 = vpow.pop %v101
    %v103 = vmul.f32 %v89, 1.442695
    %v104 = vpow.pop %v103
    %v105 = vmul.f32 %v90, 1.442695
    %v106 = vpow.pop %v105
    %v107 = vmul.f32 %v91, 1.442695
    %v108 = vpow.pop %v107
    %v109 = vmul.f32 %v92, 1.442695
    %v110 = vpow.pop %v109
    %v111 = vmul.f32 %v93, 1.442695
    %v112 = vpow.pop %v111
    %v113 = vmul.f32 %v94, 1.442695
    %v114 = vpow.pop %v113
    %v115 = vadd.f32 %v96, 1.0
    %v116 = vadd.f32 %v98, 1.0
    %v117 = vadd.f32 %v100, 1.0
    %v118 = vadd.f32 %v102, 1.0
    %v119 = vadd.f32 %v104, 1.0
    %v120 = vadd.f32 %v106, 1.0
    %v121 = vadd.f32 %v108, 1.0
    %v122 = vadd.f32 %v110, 1.0
    %v123 = vadd.f32 %v112, 1.0
    %v124 = vadd.f32 %v114, 1.0
    %v125 = vrcp.pop %v115
    %v126 = vmul.f32 1.0, %v125
    %v127 = vrcp.pop %v116
    %v128 = vmul.f32 1.0, %v127
    %v129 = vrcp.pop %v117
    %v130 = vmul.f32 1.0, %v129
    %v131 = vrcp.pop %v118
    %v132 = vmul.f32 1.0, %v131
    %v133 = vrcp.pop %v119
    %v134 = vmul.f32 1.0, %v133
    %v135 = vrcp.pop %v120
    %v136 = vmul.f32 1.0, %v135
    %v137 = vrcp.pop %v121
    %v138 = vmul.f32 1.0, %v137
    %v139 = vrcp.pop %v122
    %v140 = vmul.f32 1.0, %v139
    %v141 = vrcp.pop %v123
    %v142 = vmul.f32 1.0, %v141
    %v143 = vrcp.pop %v124
    %v144 = vmul.f32 1.0, %v143
    %v145 = vmul.f32 %v126, %v75
    %v146 = vmul.f32 %v128, %v76
    %v147 = vmul.f32 %v130, %v77
    %v148 = vmul.f32 %v132, %v78
    %v149 = vmul.f32 %v134, %v79
    %v150 = vmul.f32 %v136, %v80
    %v151 = vmul.f32 %v138, %v81
    %v152 = vmul.f32 %v140, %v82
    %v153 = vmul.f32 %v142, %v83
    %v154 = vmul.f32 %v144, %v84
    %s155 = sadd.s32 0, 0
    %s156 = smul.u32 %s155, 80
    %v157 = vlaneseq
    %v158 = vshrl.u32 %v157, 7
    %v159 = vadd.s32 %v158, 8
    %v160 = vadd.s32 %v158, 16
    %v161 = vadd.s32 %v158, 24
    %v162 = vadd.s32 %v158, 32
    %v163 = vadd.s32 %v158, 40
    %v164 = vadd.s32 %v158, 48
    %v165 = vadd.s32 %v158, 56
    %v166 = vadd.s32 %v158, 64
    %v167 = vadd.s32 %v158, 72
    %v168 = vstv %s156
    %v169 = vadd.s32 %v168, %v158
    %v170 = vadd.s32 %v168, %v159
    %v171 = vadd.s32 %v168, %v160
    %v172 = vadd.s32 %v168, %v161
    %v173 = vadd.s32 %v168, %v162
    %v174 = vadd.s32 %v168, %v163
    %v175 = vadd.s32 %v168, %v164
    %v176 = vadd.s32 %v168, %v165
    %v177 = vadd.s32 %v168, %v166
    %v178 = vadd.s32 %v168, %v167
    %vm179 = vcmp.lt.s32.totalorder %v169, 79
    %vm180 = vcmp.lt.s32.totalorder %v170, 79
    %vm181 = vcmp.lt.s32.totalorder %v171, 79
    %vm182 = vcmp.lt.s32.totalorder %v172, 79
    %vm183 = vcmp.lt.s32.totalorder %v173, 79
    %vm184 = vcmp.lt.s32.totalorder %v174, 79
    %vm185 = vcmp.lt.s32.totalorder %v175, 79
    %vm186 = vcmp.lt.s32.totalorder %v176, 79
    %vm187 = vcmp.lt.s32.totalorder %v177, 79
    %vm188 = vcmp.lt.s32.totalorder %v178, 79
    %v189 = vsel %vm179, %v145, 0.0
    %v190 = vsel %vm180, %v146, 0.0
    %v191 = vsel %vm181, %v147, 0.0
    %v192 = vsel %vm182, %v148, 0.0
    %v193 = vsel %vm183, %v149, 0.0
    %v194 = vsel %vm184, %v150, 0.0
    %v195 = vsel %vm185, %v151, 0.0
    %v196 = vsel %vm186, %v152, 0.0
    %v197 = vsel %vm187, %v153, 0.0
    %v198 = vsel %vm188, %v154, 0.0
    %v199 = vld [vmem:[#allocation2] sm:$0xff]
    %v200 = vadd.f32 %v189, %v190
    %v201 = vadd.f32 %v200, %v191
    %v202 = vadd.f32 %v201, %v192
    %v203 = vadd.f32 %v202, %v193
    %v204 = vadd.f32 %v203, %v194
    %v205 = vadd.f32 %v204, %v195
    %v206 = vadd.f32 %v205, %v196
    %v207 = vadd.f32 %v206, %v197
    %v208 = vadd.f32 %v207, %v198
    %v209 = vadd.f32 %v199, %v208
    %210 = vst [vmem:[#allocation2] sm:$0xff] %v209
    // Predicated region
    $region22: #{tpu_custom_call.1} parent=1 // pred_check
      %p211 = pneg %p60
    $region23: #{tpu_custom_call.1} parent=1 // pred_check_branch
      %213 = sbr.rel (%p211) target = $region25
    $region24: #{tpu_custom_call.1} parent=1 // pred_region
      %v214 = vld [vmem:[#allocation2] sm:$0xff]
      %215 = vst [vmem:[#allocation8] sm:$0xff] %v214
    $region25: #{tpu_custom_call.1} parent=1 // pred_fallthru
      _
    // Predicated region
    $region26: #{tpu_custom_call.1} parent=1 // pred_check
      _
    $region27: #{tpu_custom_call.1} parent=1 // pred_check_branch
      %217 = sbr.rel (0) target = $region29
    $region28: #{tpu_custom_call.1} parent=1 // pred_region
      %s219 = ssub.s32 128, 128
      %220 = vsyncadd [#allocation5], %s219
      %s222 = sshll.u32 [#allocation8], 4
      %s223 = int_to_ptr.vmem [resolvable:$true] %s222
      %225 = dma.vmem_to_hbm [thread:$0]  %s223, 128, %s2, [#allocation5]
    $region29: #{tpu_custom_call.1} parent=1 // pred_fallthru
      _
    // Predicated region
    $region30: #{tpu_custom_call.1} parent=1 // pred_check
      _
    $region31: #{tpu_custom_call.1} parent=1 // pred_check_branch
      %227 = sbr.rel (0) target = $region33
    $region32: #{tpu_custom_call.1} parent=1 // pred_region
      %228 = dma.done [#allocation5], 128
    $region33: #{tpu_custom_call.1} parent=1 // pred_fallthru
      _
    %229 = vsyncpa [#allocation4], 1
    %230 = vsyncpa [#allocation7], 1
    %231 = vsyncpa [#allocation5], 1

</llo_original>
